<compile_context>
chip_gen: v7x
topology: tpu7x:2x2x1
jax: 0.10.0
libtpu: 0.0.40
codegen_flags: <defaults>
</compile_context>

<pallas_src>
import functools
import math

import jax
import jax.numpy as jnp
from jax.experimental import pallas as pl
from jax.experimental.pallas import tpu as pltpu

EMBEDDING_DIM = 32
FF_HIDDEN_DIM = 64


def _round_up(a, b):
    return (a + b - 1) // b * b


def _block_diag(w, n):
    """(A, B) -> (n*A, n*B) block-diagonal with n copies of w."""
    if n == 1:
        return w
    a, b = w.shape
    eye = jnp.eye(n, dtype=w.dtype)
    return jnp.einsum("tu,ab->taub", eye, w).reshape(n * a, n * b)


def _default_tm_packed():
    """Per-generation packed-row tile (all fit the default scoped VMEM)."""
    try:
        kind = jax.devices()[0].device_kind.lower()
    except Exception:  # pragma: no cover - defensive
        kind = ""
    if "v7" in kind:
        return 4096     # ~16 MB/step footprint << 32 MiB scoped; feeds 3.2 TB/s HBM
    if "v6" in kind:
        return 2048     # ~8 MB/step
    return 1024         # v5e (16 MiB scoped) & unknown: ~4 MB/step


def ffn_kernel(x_ref, w1_ref, b1_ref, w2_ref, b2_ref, o_ref, *,
               mxu_dtype, approximate_gelu):
    # x_ref : (tm_p, pack*E)   packed activations (lane-dense when pack*E==128)
    # w1_ref: (pack*E, pack*H) block-diagonal W1^T
    # b1_ref: (1, pack*H)      tiled bias
    # w2_ref: (pack*H, pack*E) block-diagonal W2^T
    # b2_ref: (1, pack*E)      tiled bias
    x = x_ref[...].astype(mxu_dtype)

    # First linear: f32 accumulation on the MXU.
    h = jnp.dot(x, w1_ref[...], preferred_element_type=jnp.float32) + b1_ref[...]

    if approximate_gelu:
        # tanh-form GELU: the transcendental rides the EUP slot instead of the
        # ~20-op VPU erf polynomial (opt-in, changes numerics slightly).
        c = math.sqrt(2.0 / math.pi)
        g = 0.5 * h * (1.0 + jnp.tanh(c * (h + 0.044715 * h * h * h)))
    else:
        # Exact GELU (erf-based) -- matches torch.nn.functional.gelu default.
        g = 0.5 * h * (1.0 + jax.lax.erf(h * (1.0 / math.sqrt(2.0))))

    # Second linear.
    y = jnp.dot(g.astype(mxu_dtype), w2_ref[...],
                preferred_element_type=jnp.float32) + b2_ref[...]

    o_ref[...] = y.astype(o_ref.dtype)


def feed_forward(x, w1, b1, w2, b2, *, tm_packed=None,
                 use_bf16=False, approximate_gelu=False):
    """x: (B, S, E). w1: (H, E) torch layout, b1: (H,), w2: (E, H), b2: (E,)."""
    B, S, E = x.shape
    H = w1.shape[0]
    M = B * S

    # Largest pack in {4, 2, 1} that divides M (so the packing reshape is a
    # pure view -> zero-copy) and keeps pack*E a divisor of 128 lanes.
    pack = 1
    for p in (4, 2):
        if 128 % (p * E) == 0 and M % p == 0:
            pack = p
            break
    EP, HP = pack * E, pack * H
    n_rows = M // pack                       # packed rows (exact, no padding)

    # --- M tiling ---------------------------------------------------------
    if tm_packed is None:
        tm_packed = _default_tm_packed()
    tm_cap = max(8, _round_up(int(tm_packed), 8))        # sublane-rule guard

    if n_rows < 64:
        tm_p = n_rows                        # single block == full dim: legal
    else:
        # >= 2 steps so v7x's two TensorCores both get work; keep it even.
        steps = max(2, pl.cdiv(n_rows, tm_cap))
        if steps % 2:
            steps += 1
        tm_p = min(tm_cap, _round_up(pl.cdiv(n_rows, steps), 8))
    grid = (pl.cdiv(n_rows, tm_p),)          # ragged last block handled by Pallas

    # --- zero-copy views + small resident weights --------------------------
    x_packed = x.reshape(n_rows, EP)         # pure view (pack divides M)

    mxu_dtype = jnp.bfloat16 if use_bf16 else jnp.float32
    w1_blk = _block_diag(w1.T, pack).astype(mxu_dtype)    # (EP, HP)
    w2_blk = _block_diag(w2.T, pack).astype(mxu_dtype)    # (HP, EP)
    b1_blk = jnp.tile(b1, pack).reshape(1, HP).astype(jnp.float32)
    b2_blk = jnp.tile(b2, pack).reshape(1, EP).astype(jnp.float32)

    w_bytes = (EP * HP + HP * EP) * (2 if use_bf16 else 4) + (HP + EP) * 4
    cost = pl.CostEstimate(
        flops=int(4 * M * E * H),                      # two matmuls
        transcendentals=int(M * H),                    # one erf/tanh per hidden
        bytes_accessed=int(4 * 2 * M * E + w_bytes))   # activations in+out + weights

    kernel = functools.partial(ffn_kernel, mxu_dtype=mxu_dtype,
                               approximate_gelu=approximate_gelu)

    out_packed = pl.pallas_call(
        kernel,
        out_shape=jax.ShapeDtypeStruct((n_rows, EP), x.dtype),
        grid_spec=pltpu.PrefetchScalarGridSpec(
            num_scalar_prefetch=0,
            grid=grid,
            in_specs=[
                pl.BlockSpec((tm_p, EP), lambda i: (i, 0)),
                pl.BlockSpec((EP, HP), lambda i: (0, 0)),
                pl.BlockSpec((1, HP), lambda i: (0, 0)),
                pl.BlockSpec((HP, EP), lambda i: (0, 0)),
                pl.BlockSpec((1, EP), lambda i: (0, 0)),
            ],
            out_specs=pl.BlockSpec((tm_p, EP), lambda i: (i, 0)),
        ),
        compiler_params=pltpu.CompilerParams(
            dimension_semantics=("parallel",)),
        cost_estimate=cost,
    )(x_packed, w1_blk, b1_blk, w2_blk, b2_blk)

    return out_packed.reshape(B, S, E)       # pure view back (no slice copy)


def _ref_forward(x, w1, b1, w2, b2):
    h = jnp.einsum("bse,he->bsh", x, w1) + b1
    g = 0.5 * h * (1.0 + jax.lax.erf(h / jnp.sqrt(2.0)))
    return jnp.einsum("bsh,eh->bse", g, w2) + b2


if __name__ == "__main__":
    key = jax.random.PRNGKey(0)
    k_x, k_w1, k_b1, k_w2, k_b2 = jax.random.split(key, 5)

    B, S = 2, 8
    x = jax.random.normal(k_x, (B, S, EMBEDDING_DIM), dtype=jnp.float32)

    # Deterministic parameter init mimicking nn.Linear (uniform +-1/sqrt(fan_in)).
    bound1 = 1.0 / math.sqrt(EMBEDDING_DIM)
    w1 = jax.random.uniform(k_w1, (FF_HIDDEN_DIM, EMBEDDING_DIM),
                            minval=-bound1, maxval=bound1, dtype=jnp.float32)
    b1 = jax.random.uniform(k_b1, (FF_HIDDEN_DIM,),
                            minval=-bound1, maxval=bound1, dtype=jnp.float32)
    bound2 = 1.0 / math.sqrt(FF_HIDDEN_DIM)
    w2 = jax.random.uniform(k_w2, (EMBEDDING_DIM, FF_HIDDEN_DIM),
                            minval=-bound2, maxval=bound2, dtype=jnp.float32)
    b2 = jax.random.uniform(k_b2, (EMBEDDING_DIM,),
                            minval=-bound2, maxval=bound2, dtype=jnp.float32)

    # 1) Small exact-path test (pack=4, single block, f32 + exact erf GELU).
    out = jax.block_until_ready(feed_forward(x, w1, b1, w2, b2))
    ref = _ref_forward(x, w1, b1, w2, b2)
    assert out.shape == (B, S, EMBEDDING_DIM)
    assert jnp.allclose(out, ref, atol=1e-5, rtol=1e-5)

    # 2) Large, odd M (no pack, multi-step, ragged last block -- fully zero-copy).
    B2, S2 = 3, 1531                         # M = 4593 (odd, not tile-multiple)
    x_big = jax.random.normal(jax.random.PRNGKey(1), (B2, S2, EMBEDDING_DIM),
                              dtype=jnp.float32)
    out_big = jax.block_until_ready(
        feed_forward(x_big, w1, b1, w2, b2, tm_packed=512))
    ref_big = _ref_forward(x_big, w1, b1, w2, b2)
    assert jnp.allclose(out_big, ref_big, atol=1e-5, rtol=1e-5)

    # 3) Opt-in perf levers (bf16 MXU operands + tanh GELU) with relaxed tolerance.
    B3, S3 = 2, 64
    x_fast = jax.random.normal(jax.random.PRNGKey(2), (B3, S3, EMBEDDING_DIM),
                               dtype=jnp.float32)
    out_fast = jax.block_until_ready(
        feed_forward(x_fast, w1, b1, w2, b2, use_bf16=True, approximate_gelu=True))
    ref_fast = _ref_forward(x_fast, w1, b1, w2, b2)
    assert jnp.allclose(out_fast, ref_fast, atol=3e-2, rtol=3e-2)

    print("KERNEL_OK")
</pallas_src>

<mosaic_0001>
module attributes {stable_mosaic.version = 11 : i64} {
  func.func @ffn_kernel(%arg0: i32, %arg1: memref<4x128xf32, #tpu.memory_space<vmem>>, %arg2: memref<128x256xf32, #tpu.memory_space<vmem>>, %arg3: memref<1x256xf32, #tpu.memory_space<vmem>>, %arg4: memref<256x128xf32, #tpu.memory_space<vmem>>, %arg5: memref<1x128xf32, #tpu.memory_space<vmem>>, %arg6: memref<4x128xf32, #tpu.memory_space<vmem>>) attributes {dimension_semantics = [#tpu.dimension_semantics<parallel>], iteration_bounds = array<i64: 1>, scalar_prefetch = 0 : i64, scratch_operands = 0 : i64, tpu.core_type = #tpu.core_type<tc>, window_params = [{transform_indices = @transform_0, window_bounds = array<i64: 4, 128>}, {pipeline_mode = #tpu.pipeline_mode<synchronous>, transform_indices = @transform_1, window_bounds = array<i64: 128, 256>}, {pipeline_mode = #tpu.pipeline_mode<synchronous>, transform_indices = @transform_2, window_bounds = array<i64: 1, 256>}, {pipeline_mode = #tpu.pipeline_mode<synchronous>, transform_indices = @transform_3, window_bounds = array<i64: 256, 128>}, {pipeline_mode = #tpu.pipeline_mode<synchronous>, transform_indices = @transform_4, window_bounds = array<i64: 1, 128>}, {transform_indices = @transform_5, window_bounds = array<i64: 4, 128>}]} {
    %c0 = arith.constant 0 : index
    %c0_0 = arith.constant 0 : index
    %0 = vector.load %arg1[%c0, %c0_0] : memref<4x128xf32, #tpu.memory_space<vmem>>, vector<4x128xf32>
    %c0_1 = arith.constant 0 : index
    %c0_2 = arith.constant 0 : index
    %1 = vector.load %arg2[%c0_1, %c0_2] : memref<128x256xf32, #tpu.memory_space<vmem>>, vector<128x256xf32>
    %cst = arith.constant dense<0.000000e+00> : vector<4x256xf32>
    %2 = tpu.matmul %0, %1, %cst {dimension_numbers = #tpu.dot_dimension_numbers<[1], [0], [0], [1], [0, 0, 1, 1], [], []>} : vector<4x128xf32>, vector<128x256xf32>, vector<4x256xf32> -> vector<4x256xf32>
    %c0_3 = arith.constant 0 : index
    %c0_4 = arith.constant 0 : index
    %3 = vector.load %arg3[%c0_3, %c0_4] : memref<1x256xf32, #tpu.memory_space<vmem>>, vector<1x256xf32>
    %4 = vector.broadcast %3 : vector<1x256xf32> to vector<4x256xf32>
    %5 = arith.addf %2, %4 : vector<4x256xf32>
    %cst_5 = arith.constant 5.000000e-01 : f32
    %6 = vector.broadcast %cst_5 : f32 to vector<4x256xf32>
    %7 = arith.mulf %6, %5 : vector<4x256xf32>
    %cst_6 = arith.constant 0.707106769 : f32
    %8 = vector.broadcast %cst_6 : f32 to vector<4x256xf32>
    %9 = arith.mulf %5, %8 : vector<4x256xf32>
    %10 = math.erf %9 : vector<4x256xf32>
    %cst_7 = arith.constant 1.000000e+00 : f32
    %11 = vector.broadcast %cst_7 : f32 to vector<4x256xf32>
    %12 = arith.addf %11, %10 : vector<4x256xf32>
    %13 = arith.mulf %7, %12 : vector<4x256xf32>
    %c0_8 = arith.constant 0 : index
    %c0_9 = arith.constant 0 : index
    %14 = vector.load %arg4[%c0_8, %c0_9] : memref<256x128xf32, #tpu.memory_space<vmem>>, vector<256x128xf32>
    %cst_10 = arith.constant dense<0.000000e+00> : vector<4x128xf32>
    %15 = tpu.matmul %13, %14, %cst_10 {dimension_numbers = #tpu.dot_dimension_numbers<[1], [0], [0], [1], [0, 0, 1, 1], [], []>} : vector<4x256xf32>, vector<256x128xf32>, vector<4x128xf32> -> vector<4x128xf32>
    %c0_11 = arith.constant 0 : index
    %c0_12 = arith.constant 0 : index
    %16 = vector.load %arg5[%c0_11, %c0_12] : memref<1x128xf32, #tpu.memory_space<vmem>>, vector<1x128xf32>
    %17 = vector.broadcast %16 : vector<1x128xf32> to vector<4x128xf32>
    %18 = arith.addf %15, %17 : vector<4x128xf32>
    %c0_13 = arith.constant 0 : index
    %c0_14 = arith.constant 0 : index
    %19 = vector.load %arg6[%c0_13, %c0_14] : memref<4x128xf32, #tpu.memory_space<vmem>>, vector<4x128xf32>
    tpu.vector_store %arg6[%c0_13, %c0_14], %18 {strides = array<i32>} : memref<4x128xf32, #tpu.memory_space<vmem>>, vector<4x128xf32>,
    return
  }
  func.func @transform_0(%arg0: i32) -> (i32, i32) {
    %c0_i32 = arith.constant 0 : i32
    %c0_i32_0 = arith.constant 0 : i32
    return %arg0, %c0_i32 : i32, i32
  }
  func.func @transform_1(%arg0: i32) -> (i32, i32) {
    %c0_i32 = arith.constant 0 : i32
    %c0_i32_0 = arith.constant 0 : i32
    %c0_i32_1 = arith.constant 0 : i32
    return %c0_i32, %c0_i32_0 : i32, i32
  }
  func.func @transform_2(%arg0: i32) -> (i32, i32) {
    %c0_i32 = arith.constant 0 : i32
    %c0_i32_0 = arith.constant 0 : i32
    %c0_i32_1 = arith.constant 0 : i32
    return %c0_i32, %c0_i32_0 : i32, i32
  }
  func.func @transform_3(%arg0: i32) -> (i32, i32) {
    %c0_i32 = arith.constant 0 : i32
    %c0_i32_0 = arith.constant 0 : i32
    %c0_i32_1 = arith.constant 0 : i32
    return %c0_i32, %c0_i32_0 : i32, i32
  }
  func.func @transform_4(%arg0: i32) -> (i32, i32) {
    %c0_i32 = arith.constant 0 : i32
    %c0_i32_0 = arith.constant 0 : i32
    %c0_i32_1 = arith.constant 0 : i32
    return %c0_i32, %c0_i32_0 : i32, i32
  }
  func.func @transform_5(%arg0: i32) -> (i32, i32) {
    %c0_i32 = arith.constant 0 : i32
    %c0_i32_0 = arith.constant 0 : i32
    return %arg0, %c0_i32 : i32, i32
  }
}

</mosaic_0001>

<llo_original>
// kernel: tpu_custom_call.1
$region0: #{tpu_custom_call.1}
  #allocation0 [shape = 'u32[]', space=smem, size = 0x4, offset = 0x4, fixed_abs, tag = 'smem constant byte address 0x4 - core index']
  #allocation1 [shape = 'u32[144,128]{1,0:T(1,128)}', space=vmem, size = 0x12000, scoped, tag = 'internal scratch']
  %s0 = inlined_call_operand.hbm [shape: f32[4,128], index: 0, kind: input, shape index: {}]
  %s1 = inlined_call_operand.hbm [shape: f32[128,256], index: 1, kind: input, shape index: {}]
  %s2 = inlined_call_operand.vmem [shape: f32[1,256], index: 2, kind: input, shape index: {}]
  %s3 = inlined_call_operand.hbm [shape: f32[256,128], index: 3, kind: input, shape index: {}]
  %s4 = inlined_call_operand.vmem [shape: f32[1,128], index: 4, kind: input, shape index: {}]
  %s5 = inlined_call_operand.hbm [shape: f32[4,128], index: 5, kind: output, shape index: {}]
  %s6 = sld [smem:[#allocation0]]
  $region42: #{tpu_custom_call.1} parent=0
    _
  %s8 = ssub.s32 1, %s6
  %s9 = scalar_select 0, %s8, %s6
  $region1: #{tpu_custom_call.1} parent=0
    #allocation2 [shape = 'u8[2048]{0}', space=vmem, size = 0x800, scoped, tag = 'input window, operand 0, single buffered']
    #allocation3 [shape = 's32[1]{0}', space=sflag, size = 0x4, scoped, tag = 'scoped memory for tpu_custom_call.1']
    #allocation4 [shape = 's32[1]{0}', space=sflag, size = 0x4, scoped, tag = 'scoped memory for tpu_custom_call.1']
    #allocation5 [shape = 'u8[131072]{0}', space=vmem, size = 0x20000, scoped, tag = 'input window, operand 1, single buffered']
    #allocation6 [shape = 's32[1]{0}', space=sflag, size = 0x4, scoped, tag = 'scoped memory for tpu_custom_call.1']
    #allocation7 [shape = 'u8[131072]{0}', space=vmem, size = 0x20000, scoped, tag = 'input window, operand 3, single buffered']
    #allocation8 [shape = 'u8[2048]{0}', space=vmem, size = 0x800, scoped, tag = 'output window, operand 0, single buffered']
    %10 = vsyncpa [#allocation3], 0
    %11 = vsyncpa [#allocation6], 0
    %12 = vsyncpa [#allocation4], 0
    // Predicated region
    $region2: #{tpu_custom_call.1} parent=1 // pred_check
      _
    $region3: #{tpu_custom_call.1} parent=1 // pred_check_branch
      %14 = sbr.rel (0) target = $region5
    $region4: #{tpu_custom_call.1} parent=1 // pred_region
      %s16 = ssub.s32 64, 64
      %17 = vsyncadd [#allocation3], %s16
      %s19 = sshll.u32 [#allocation2], 4
      %s20 = int_to_ptr.vmem [resolvable:$true] %s19
      %22 = dma.hbm_to_vmem [thread:$0]  %s0, 64, %s20, [#allocation3]
    $region5: #{tpu_custom_call.1} parent=1 // pred_fallthru
      _
    // Predicated region
    $region6: #{tpu_custom_call.1} parent=1 // pred_check
      _
    $region7: #{tpu_custom_call.1} parent=1 // pred_check_branch
      %24 = sbr.rel (0) target = $region9
    $region8: #{tpu_custom_call.1} parent=1 // pred_region
      %s26 = ssub.s32 4096, 4096
      %27 = vsyncadd [#allocation6], %s26
      %s28 = sshll.u32 [#allocation5], 4
      %s29 = int_to_ptr.vmem [resolvable:$true] %s28
      %34 = dma.hbm_to_vmem [thread:$0]  %s1, 4096, %s29, [#allocation6], 256, 256, 16
    $region9: #{tpu_custom_call.1} parent=1 // pred_fallthru
      _
    // Predicated region
    $region10: #{tpu_custom_call.1} parent=1 // pred_check
      _
    $region11: #{tpu_custom_call.1} parent=1 // pred_check_branch
      %36 = sbr.rel (0) target = $region13
    $region12: #{tpu_custom_call.1} parent=1 // pred_region
      _
    $region13: #{tpu_custom_call.1} parent=1 // pred_fallthru
      _
    // Predicated region
    $region14: #{tpu_custom_call.1} parent=1 // pred_check
      _
    $region15: #{tpu_custom_call.1} parent=1 // pred_check_branch
      %38 = sbr.rel (0) target = $region17
    $region16: #{tpu_custom_call.1} parent=1 // pred_region
      %s40 = ssub.s32 4096, 4096
      %41 = vsyncadd [#allocation6], %s40
      %s42 = sshll.u32 [#allocation7], 4
      %s43 = int_to_ptr.vmem [resolvable:$true] %s42
      %48 = dma.hbm_to_vmem [thread:$0]  %s3, 4096, %s43, [#allocation6], 128, 128, 8
    $region17: #{tpu_custom_call.1} parent=1 // pred_fallthru
      _
    // Predicated region
    $region18: #{tpu_custom_call.1} parent=1 // pred_check
      _
    $region19: #{tpu_custom_call.1} parent=1 // pred_check_branch
      %50 = sbr.rel (0) target = $region21
    $region20: #{tpu_custom_call.1} parent=1 // pred_region
      _
    $region21: #{tpu_custom_call.1} parent=1 // pred_fallthru
      _
    // Predicated region
    $region22: #{tpu_custom_call.1} parent=1 // pred_check
      _
    $region23: #{tpu_custom_call.1} parent=1 // pred_check_branch
      %52 = sbr.rel (0) target = $region25
    $region24: #{tpu_custom_call.1} parent=1 // pred_region
      %53 = dma.done [#allocation3], 64
    $region25: #{tpu_custom_call.1} parent=1 // pred_fallthru
      _
    // Predicated region
    $region26: #{tpu_custom_call.1} parent=1 // pred_check
      _
    $region27: #{tpu_custom_call.1} parent=1 // pred_check_branch
      %55 = sbr.rel (0) target = $region29
    $region28: #{tpu_custom_call.1} parent=1 // pred_region
      %56 = dma.done [#allocation6], 4096
    $region29: #{tpu_custom_call.1} parent=1 // pred_fallthru
      _
    // Predicated region
    $region30: #{tpu_custom_call.1} parent=1 // pred_check
      _
    $region31: #{tpu_custom_call.1} parent=1 // pred_check_branch
      %58 = sbr.rel (0) target = $region33
    $region32: #{tpu_custom_call.1} parent=1 // pred_region
      %59 = dma.done [#allocation6], 4096
    $region33: #{tpu_custom_call.1} parent=1 // pred_fallthru
      _
    %v60 = vld [vmem:[#allocation2] sm:$0xf]
    %v61 = vld [vmem:[#allocation5] sm:$0xff]
    %v62 = vld [vmem:[#allocation5 + $0x8] sm:$0xff]
    %v63 = vld [vmem:[#allocation5 + $0x10] sm:$0xff]
    %v64 = vld [vmem:[#allocation5 + $0x18] sm:$0xff]
    %v65 = vld [vmem:[#allocation5 + $0x20] sm:$0xff]
    %v66 = vld [vmem:[#allocation5 + $0x28] sm:$0xff]
    %v67 = vld [vmem:[#allocation5 + $0x30] sm:$0xff]
    %v68 = vld [vmem:[#allocation5 + $0x38] sm:$0xff]
    %v69 = vld [vmem:[#allocation5 + $0x40] sm:$0xff]
    %v70 = vld [vmem:[#allocation5 + $0x48] sm:$0xff]
    %v71 = vld [vmem:[#allocation5 + $0x50] sm:$0xff]
    %v72 = vld [vmem:[#allocation5 + $0x58] sm:$0xff]
    %v73 = vld [vmem:[#allocation5 + $0x60] sm:$0xff]
    %v74 = vld [vmem:[#allocation5 + $0x68] sm:$0xff]
    %v75 = vld [vmem:[#allocation5 + $0x70] sm:$0xff]
    %v76 = vld [vmem:[#allocation5 + $0x78] sm:$0xff]
    %v77 = vld [vmem:[#allocation5 + $0x80] sm:$0xff]
    %v78 = vld [vmem:[#allocation5 + $0x88] sm:$0xff]
    %v79 = vld [vmem:[#allocation5 + $0x90] sm:$0xff]
    %v80 = vld [vmem:[#allocation5 + $0x98] sm:$0xff]
    %v81 = vld [vmem:[#allocation5 + $0xa0] sm:$0xff]
    %v82 = vld [vmem:[#allocation5 + $0xa8] sm:$0xff]
    %v83 = vld [vmem:[#allocation5 + $0xb0] sm:$0xff]
    %v84 = vld [vmem:[#allocation5 + $0xb8] sm:$0xff]
    %v85 = vld [vmem:[#allocation5 + $0xc0] sm:$0xff]
    %v86 = vld [vmem:[#allocation5 + $0xc8] sm:$0xff]
    %v87 = vld [vmem:[#allocation5 + $0xd0] sm:$0xff]
    %v88 = vld [vmem:[#allocation5 + $0xd8] sm:$0xff]
    %v89 = vld [vmem:[#allocation5 + $0xe0] sm:$0xff]
    %v90 = vld [vmem:[#allocation5 + $0xe8] sm:$0xff]
    %v91 = vld [vmem:[#allocation5 + $0xf0] sm:$0xff]
    %v92 = vld [vmem:[#allocation5 + $0xf8] sm:$0xff]
    %v93 = vld [vmem:[%s2] sm:$0x3]
    %v95 = vlaneseq
    %v96 = vshrl.u32 %v95, 7
    %v97 = vsub.s32 0, %v96
    %v98 = vrot.slane %v93, %v97
    %v99 = vlaneseq
    %v100 = vshrl.u32 %v99, 7
    %v101 = vsub.s32 1, %v100
    %v102 = vrot.slane %v93, %v101
    %105 = vmatprep.subr.mxu0 %v62
    %106 = vmatpush1.msra.mxu0 %v61
    %107 = vmatprep.subr.mxu0 %v64
    %108 = vmatpush1.msra.mxu0 %v63
    %109 = vmatprep.subr.mxu0 %v66
    %110 = vmatpush1.msra.mxu0 %v65
    %111 = vmatprep.subr.mxu0 %v68
    %112 = vmatpush1.msra.mxu0 %v67
    %113 = vmatprep.subr.mxu0 %v70
    %114 = vmatpush1.msra.mxu0 %v69
    %115 = vmatprep.subr.mxu0 %v72
    %116 = vmatpush1.msra.mxu0 %v71
    %117 = vmatprep.subr.mxu0 %v74
    %118 = vmatpush1.msra.mxu0 %v73
    %119 = vmatprep.subr.mxu0 %v76
    %120 = vmatpush1.msra.mxu0 %v75
    %121 = vmatprep.subr.mxu0 %v78
    %122 = vmatpush1.msra.mxu0 %v77
    %123 = vmatprep.subr.mxu0 %v80
    %124 = vmatpush1.msra.mxu0 %v79
    %125 = vmatprep.subr.mxu0 %v82
    %126 = vmatpush1.msra.mxu0 %v81
    %127 = vmatprep.subr.mxu0 %v84
    %128 = vmatpush1.msra.mxu0 %v83
    %129 = vmatprep.subr.mxu0 %v86
    %130 = vmatpush1.msra.mxu0 %v85
    %131 = vmatprep.subr.mxu0 %v88
    %132 = vmatpush1.msra.mxu0 %v87
    %133 = vmatprep.subr.mxu0 %v90
    %134 = vmatpush1.msra.mxu0 %v89
    %135 = vmatprep.subr.mxu0 %v92
    %136 = vmatpush1.msra.mxu0 %v91
    %137 = vmatprep.subr.mxu0 0.0
    %138 = vmatpush1.msra.mxu0 0.0
    %139 = vmatprep.subr.mxu0 0.0
    %140 = vmatpush1.msra.mxu0 0.0
    %141 = vmatprep.subr.mxu0 0.0
    %142 = vmatpush1.msra.mxu0 0.0
    %143 = vmatprep.subr.mxu0 0.0
    %144 = vmatpush1.msra.mxu0 0.0
    %145 = vmatprep.subr.mxu0 0.0
    %146 = vmatpush1.msra.mxu0 0.0
    %147 = vmatprep.subr.mxu0 0.0
    %148 = vmatpush1.msra.mxu0 0.0
    %149 = vmatprep.subr.mxu0 0.0
    %150 = vmatpush1.msra.mxu0 0.0
    %151 = vmatprep.subr.mxu0 0.0
    %152 = vmatpush1.msra.mxu0 0.0
    %153 = vmatprep.subr.mxu0 0.0
    %154 = vmatpush1.msra.mxu0 0.0
    %155 = vmatprep.subr.mxu0 0.0
    %156 = vmatpush1.msra.mxu0 0.0
    %157 = vmatprep.subr.mxu0 0.0
    %158 = vmatpush1.msra.mxu0 0.0
    %159 = vmatprep.subr.mxu0 0.0
    %160 = vmatpush1.msra.mxu0 0.0
    %161 = vmatprep.subr.mxu0 0.0
    %162 = vmatpush1.msra.mxu0 0.0
    %163 = vmatprep.subr.mxu0 0.0
    %164 = vmatpush1.msra.mxu0 0.0
    %165 = vmatprep.subr.mxu0 0.0
    %166 = vmatpush1.msra.mxu0 0.0
    %167 = vmatprep.subr.mxu0 0.0
    %168 = vmatpush1.msra.mxu0 0.0
    %169 = vmatprep.mubr.f32.mxu0 0.0
    %170 = vmatmul.mubr.f32.gmra.mrb[0].mxu0 %v60
    %v171 = vpop.f32.mrb[0].mxu0
    %v172 = vadd.f32 %v98, %v171
    %v173 = vpop.f32.mrb[0].mxu0
    %v174 = vadd.f32 %v102, %v173
    %175 = vdwg.mxu0
    %v176 = vmul.f32 %v172, 0.5
    %v177 = vmul.f32 %v174, 0.5
    %v178 = vmul.f32 %v172, 0.70710677
    %v179 = vmul.f32 %v174, 0.70710677
    %v180 = verf.f32.pop %v178
    %v181 = verf.f32.pop %v179
    %v182 = vadd.f32 %v180, 1.0
    %v183 = vadd.f32 %v181, 1.0
    %v184 = vmul.f32 %v176, %v182
    %v185 = vmul.f32 %v177, %v183
    %v186 = vld [vmem:[#allocation7] sm:$0xff]
    %v187 = vld [vmem:[#allocation7 + $0x8] sm:$0xff]
    %v188 = vld [vmem:[#allocation7 + $0x10] sm:$0xff]
    %v189 = vld [vmem:[#allocation7 + $0x18] sm:$0xff]
    %v190 = vld [vmem:[#allocation7 + $0x20] sm:$0xff]
    %v191 = vld [vmem:[#allocation7 + $0x28] sm:$0xff]
    %v192 = vld [vmem:[#allocation7 + $0x30] sm:$0xff]
    %v193 = vld [vmem:[#allocation7 + $0x38] sm:$0xff]
    %v194 = vld [vmem:[#allocation7 + $0x40] sm:$0xff]
    %v195 = vld [vmem:[#allocation7 + $0x48] sm:$0xff]
    %v196 = vld [vmem:[#allocation7 + $0x50] sm:$0xff]
    %v197 = vld [vmem:[#allocation7 + $0x58] sm:$0xff]
    %v198 = vld [vmem:[#allocation7 + $0x60] sm:$0xff]
    %v199 = vld [vmem:[#allocation7 + $0x68] sm:$0xff]
    %v200 = vld [vmem:[#allocation7 + $0x70] sm:$0xff]
    %v201 = vld [vmem:[#allocation7 + $0x78] sm:$0xff]
    %v202 = vld [vmem:[#allocation7 + $0x80] sm:$0xff]
    %v203 = vld [vmem:[#allocation7 + $0x88] sm:$0xff]
    %v204 = vld [vmem:[#allocation7 + $0x90] sm:$0xff]
    %v205 = vld [vmem:[#allocation7 + $0x98] sm:$0xff]
    %v206 = vld [vmem:[#allocation7 + $0xa0] sm:$0xff]
    %v207 = vld [vmem:[#allocation7 + $0xa8] sm:$0xff]
    %v208 = vld [vmem:[#allocation7 + $0xb0] sm:$0xff]
    %v209 = vld [vmem:[#allocation7 + $0xb8] sm:$0xff]
    %v210 = vld [vmem:[#allocation7 + $0xc0] sm:$0xff]
    %v211 = vld [vmem:[#allocation7 + $0xc8] sm:$0xff]
    %v212 = vld [vmem:[#allocation7 + $0xd0] sm:$0xff]
    %v213 = vld [vmem:[#allocation7 + $0xd8] sm:$0xff]
    %v214 = vld [vmem:[#allocation7 + $0xe0] sm:$0xff]
    %v215 = vld [vmem:[#allocation7 + $0xe8] sm:$0xff]
    %v216 = vld [vmem:[#allocation7 + $0xf0] sm:$0xff]
    %v217 = vld [vmem:[#allocation7 + $0xf8] sm:$0xff]
    %v218 = vld [vmem:[%s4] sm:$0x1]
    %v220 = vlaneseq
    %v221 = vshrl.u32 %v220, 7
    %v222 = vsub.s32 0, %v221
    %v223 = vrot.slane %v218, %v222
    %225 = vmatprep.subr.mxu0 0.0
    %226 = vmatpush1.msra.mxu0 %v186
    %227 = vmatprep.subr.mxu0 0.0
    %228 = vmatpush1.msra.mxu0 %v187
    %229 = vmatprep.subr.mxu0 0.0
    %230 = vmatpush1.msra.mxu0 %v188
    %231 = vmatprep.subr.mxu0 0.0
    %232 = vmatpush1.msra.mxu0 %v189
    %233 = vmatprep.subr.mxu0 0.0
    %234 = vmatpush1.msra.mxu0 %v190
    %235 = vmatprep.subr.mxu0 0.0
    %236 = vmatpush1.msra.mxu0 %v191
    %237 = vmatprep.subr.mxu0 0.0
    %238 = vmatpush1.msra.mxu0 %v192
    %239 = vmatprep.subr.mxu0 0.0
    %240 = vmatpush1.msra.mxu0 %v193
    %241 = vmatprep.subr.mxu0 0.0
    %242 = vmatpush1.msra.mxu0 %v194
    %243 = vmatprep.subr.mxu0 0.0
    %244 = vmatpush1.msra.mxu0 %v195
    %245 = vmatprep.subr.mxu0 0.0
    %246 = vmatpush1.msra.mxu0 %v196
    %247 = vmatprep.subr.mxu0 0.0
    %248 = vmatpush1.msra.mxu0 %v197
    %249 = vmatprep.subr.mxu0 0.0
    %250 = vmatpush1.msra.mxu0 %v198
    %251 = vmatprep.subr.mxu0 0.0
    %252 = vmatpush1.msra.mxu0 %v199
    %253 = vmatprep.subr.mxu0 0.0
    %254 = vmatpush1.msra.mxu0 %v200
    %255 = vmatprep.subr.mxu0 0.0
    %256 = vmatpush1.msra.mxu0 %v201
    %257 = vmatprep.subr.mxu0 0.0
    %258 = vmatpush1.msra.mxu0 %v202
    %259 = vmatprep.subr.mxu0 0.0
    %260 = vmatpush1.msra.mxu0 %v203
    %261 = vmatprep.subr.mxu0 0.0
    %262 = vmatpush1.msra.mxu0 %v204
    %263 = vmatprep.subr.mxu0 0.0
    %264 = vmatpush1.msra.mxu0 %v205
    %265 = vmatprep.subr.mxu0 0.0
    %266 = vmatpush1.msra.mxu0 %v206
    %267 = vmatprep.subr.mxu0 0.0
    %268 = vmatpush1.msra.mxu0 %v207
    %269 = vmatprep.subr.mxu0 0.0
    %270 = vmatpush1.msra.mxu0 %v208
    %271 = vmatprep.subr.mxu0 0.0
    %272 = vmatpush1.msra.mxu0 %v209
    %273 = vmatprep.subr.mxu0 0.0
    %274 = vmatpush1.msra.mxu0 %v210
    %275 = vmatprep.subr.mxu0 0.0
    %276 = vmatpush1.msra.mxu0 %v211
    %277 = vmatprep.subr.mxu0 0.0
    %278 = vmatpush1.msra.mxu0 %v212
    %279 = vmatprep.subr.mxu0 0.0
    %280 = vmatpush1.msra.mxu0 %v213
    %281 = vmatprep.subr.mxu0 0.0
    %282 = vmatpush1.msra.mxu0 %v214
    %283 = vmatprep.subr.mxu0 0.0
    %284 = vmatpush1.msra.mxu0 %v215
    %285 = vmatprep.subr.mxu0 0.0
    %286 = vmatpush1.msra.mxu0 %v216
    %287 = vmatprep.subr.mxu0 0.0
    %288 = vmatpush1.msra.mxu0 %v217
    %289 = vmatprep.mubr.f32.mxu0 %v185
    %290 = vmatmul.mubr.f32.gmra.mrb[0].mxu0 %v184
    %v291 = vpop.f32.mrb[0].mxu0
    %v292 = vadd.f32 %v223, %v291
    %v293 = vpop.f32.mrb[0].mxu0
    %294 = vdwg.mxu0
    %295 = vst [vmem:[#allocation8] sm:$0xf] %v292
    // Predicated region
    $region34: #{tpu_custom_call.1} parent=1 // pred_check
      _
    $region35: #{tpu_custom_call.1} parent=1 // pred_check_branch
      %297 = sbr.rel (0) target = $region37
    $region36: #{tpu_custom_call.1} parent=1 // pred_region
      %s299 = ssub.s32 64, 64
      %300 = vsyncadd [#allocation4], %s299
      %s302 = sshll.u32 [#allocation8], 4
      %s303 = int_to_ptr.vmem [resolvable:$true] %s302
      %305 = dma.vmem_to_hbm [thread:$0]  %s303, 64, %s5, [#allocation4]
    $region37: #{tpu_custom_call.1} parent=1 // pred_fallthru
      _
    // Predicated region
    $region38: #{tpu_custom_call.1} parent=1 // pred_check
      _
    $region39: #{tpu_custom_call.1} parent=1 // pred_check_branch
      %307 = sbr.rel (0) target = $region41
    $region40: #{tpu_custom_call.1} parent=1 // pred_region
      %308 = dma.done [#allocation4], 64
    $region41: #{tpu_custom_call.1} parent=1 // pred_fallthru
      _
    %309 = vsyncpa [#allocation3], 1
    %310 = vsyncpa [#allocation6], 1
    %311 = vsyncpa [#allocation4], 1

</llo_original>
